<compile_context>
chip_gen: v7x
topology: tpu7x:2x2x1
jax: 0.10.0
libtpu: 0.0.40
codegen_flags: <defaults>
</compile_context>

<pallas_src>
import jax
import jax.numpy as jnp
from jax.experimental import pallas as pl
from jax.experimental.pallas import tpu as pltpu


def _round_up(x, m):
    return (x + m - 1) // m * m


def prepare_linreg_params(weight, bias, *, lane=128):
    """One-time (init-time) parameter prep.

    Transposes the PyTorch (D_out, D_in) weight to (D_in, D_out) and zero-pads
    the output dim to a multiple of `lane` so every kernel store is an
    unmasked, lane-dense `vst`.  (Use lane=256 on v6e/v7x if D_out is large.)
    """
    d_out, d_in = weight.shape
    d_out_p = _round_up(d_out, lane)
    w_t_pad = jnp.zeros((d_in, d_out_p), weight.dtype).at[:, :d_out].set(weight.T)
    b_pad = jnp.zeros((1, d_out_p), bias.dtype).at[0, :d_out].set(bias)
    return w_t_pad, b_pad


# --- kernels -----------------------------------------------------------------

def _kernel_single_k(x_ref, w_ref, b_ref, o_ref):
    # Whole contraction dim in one block: fused matmul + bias, no scratch
    # accumulator, no epilogue copy.
    o_ref[...] = (
        jnp.dot(x_ref[...], w_ref[...], preferred_element_type=jnp.float32)
        + b_ref[...]
    ).astype(o_ref.dtype)


def _kernel_multi_k_f32out(x_ref, w_ref, b_ref, o_ref):
    # K split across grid axis 2; the output block index is (i, j) for every k,
    # so o_ref stays VMEM-resident and we accumulate directly into it.
    k = pl.program_id(2)

    @pl.when(k == 0)
    def _():
        o_ref[...] = jnp.broadcast_to(b_ref[...], o_ref.shape).astype(o_ref.dtype)

    o_ref[...] += jnp.dot(x_ref[...], w_ref[...],
                          preferred_element_type=jnp.float32)


def _kernel_multi_k_acc(x_ref, w_ref, b_ref, o_ref, acc_ref):
    # K split + non-f32 output: f32 VMEM accumulator; bias add and downcast
    # only in the last-K epilogue.
    k = pl.program_id(2)

    @pl.when(k == 0)
    def _():
        acc_ref[...] = jnp.zeros_like(acc_ref)

    acc_ref[...] += jnp.dot(x_ref[...], w_ref[...],
                            preferred_element_type=jnp.float32)

    @pl.when(k == pl.num_programs(2) - 1)
    def _():
        o_ref[...] = (acc_ref[...] + b_ref[...]).astype(o_ref.dtype)


# --- wrapper -----------------------------------------------------------------

_SINGLE_K_MAX = 2048              # contraction dims up to this stay in one block
_RESIDENT_W_MAX_BYTES = 2 << 20   # keep the whole weight VMEM-resident below this


def linreg_forward(x, w_t_pad, b_pad, d_out):
    """x: (..., D_in); w_t_pad: (D_in, D_out_p) transposed+padded weight;
    b_pad: (1, D_out_p); d_out: logical output width.  Returns (..., d_out)."""
    *lead, D_in = x.shape
    x2 = x.reshape(-1, D_in)
    B = x2.shape[0]
    K_w, D_out_p = w_t_pad.shape
    assert K_w == D_in, "weight / input feature-dim mismatch"

    # ---- M tiling: no per-call copy of x in the common case. ----
    if B >= 8:
        tm = min(256, (B // 8) * 8)        # multiple of 8, <= B
        x_in, M = x2, B
    else:                                  # tiny batch: pad rows once (cheap)
        tm, M = 8, 8
        x_in = jnp.zeros((8, D_in), x2.dtype).at[:B].set(x2)
    m_grid = pl.cdiv(M, tm)                # partial last block handled by Pallas

    itemsize = jnp.dtype(x.dtype).itemsize
    w_itemsize = jnp.dtype(w_t_pad.dtype).itemsize
    w_bytes = D_in * D_out_p * w_itemsize
    single_k = D_in <= _SINGLE_K_MAX

    # ---- N tiling: keep the whole weight VMEM-resident when it is small. ----
    if single_k and w_bytes <= _RESIDENT_W_MAX_BYTES and D_out_p <= 2048:
        tn = D_out_p                       # W DMA'd once, reused for every M tile
    elif D_out_p % 256 == 0:
        tn = 256
    else:
        tn = 128
    n_grid = D_out_p // tn

    cost = pl.CostEstimate(
        flops=2 * M * D_in * D_out_p,
        bytes_accessed=itemsize * (M * D_in + M * D_out_p)
        + w_itemsize * (D_in * D_out_p + D_out_p),
        transcendentals=0)

    if single_k:
        out_p = pl.pallas_call(
            _kernel_single_k,
            out_shape=jax.ShapeDtypeStruct((M, D_out_p), x.dtype),
            grid_spec=pltpu.PrefetchScalarGridSpec(
                num_scalar_prefetch=0,
                grid=(m_grid, n_grid),
                in_specs=[
                    pl.BlockSpec((tm, D_in), lambda i, j: (i, 0)),    # x
                    pl.BlockSpec((D_in, tn), lambda i, j: (0, j)),    # W^T
                    pl.BlockSpec((1, tn), lambda i, j: (0, j)),       # bias
                ],
                out_specs=pl.BlockSpec((tm, tn), lambda i, j: (i, j)),
            ),
            compiler_params=pltpu.CompilerParams(
                dimension_semantics=("parallel", "parallel")),
            cost_estimate=cost,
        )(x_in, w_t_pad, b_pad)
    else:
        # Large contraction dim: split K over grid axis 2 ("arbitrary").
        K_p = _round_up(D_in, 128)
        tk = next(c for c in (1024, 512, 256, 128) if K_p % c == 0)
        if K_p != D_in:
            # TODO(synk): rare path; pads K per call. Pre-pad at init if hit often.
            x_in = jnp.zeros((M, K_p), x_in.dtype).at[:, :D_in].set(x_in)
            w_in = jnp.zeros((K_p, D_out_p), w_t_pad.dtype).at[:D_in].set(w_t_pad)
        else:
            w_in = w_t_pad
        k_grid = K_p // tk

        f32_out = jnp.dtype(x.dtype) == jnp.float32
        kernel = _kernel_multi_k_f32out if f32_out else _kernel_multi_k_acc
        scratch = [] if f32_out else [pltpu.VMEM((tm, tn), jnp.float32)]

        out_p = pl.pallas_call(
            kernel,
            out_shape=jax.ShapeDtypeStruct((M, D_out_p), x.dtype),
            grid_spec=pltpu.PrefetchScalarGridSpec(
                num_scalar_prefetch=0,
                grid=(m_grid, n_grid, k_grid),
                in_specs=[
                    pl.BlockSpec((tm, tk), lambda i, j, k: (i, k)),   # x
                    pl.BlockSpec((tk, tn), lambda i, j, k: (k, j)),   # W^T
                    pl.BlockSpec((1, tn), lambda i, j, k: (0, j)),    # bias
                ],
                out_specs=pl.BlockSpec((tm, tn), lambda i, j, k: (i, j)),
                scratch_shapes=scratch,
            ),
            compiler_params=pltpu.CompilerParams(
                dimension_semantics=("parallel", "parallel", "arbitrary")),
            cost_estimate=cost,
        )(x_in, w_in, b_pad)

    out = out_p[:B, :d_out]
    return out.reshape(*lead, d_out)


if __name__ == "__main__":
    # Small shapes implied by the module: input_dims=32, output_dims=16, batch=8.
    B, D_in, D_out = 8, 32, 16

    key = jax.random.PRNGKey(0)
    kx, kw, kb = jax.random.split(key, 3)

    x = jax.random.normal(kx, (B, D_in), dtype=jnp.float32)
    # Deterministic "init" mimicking nn.Linear's uniform(-1/sqrt(fan_in), ...)
    bound = 1.0 / (D_in ** 0.5)
    weight = jax.random.uniform(kw, (D_out, D_in), minval=-bound, maxval=bound,
                                dtype=jnp.float32)
    bias = jax.random.uniform(kb, (D_out,), minval=-bound, maxval=bound,
                              dtype=jnp.float32)

    # One-time parameter prep (transpose + lane-dense output padding).
    w_t_pad, b_pad = prepare_linreg_params(weight, bias)

    out = linreg_forward(x, w_t_pad, b_pad, D_out)
    jax.block_until_ready(out)

    # Correctness check vs. plain JAX reference (same semantics as nn.Linear).
    ref = x @ weight.T + bias
    assert out.shape == (B, D_out)
    assert jnp.allclose(out, ref, atol=1e-5, rtol=1e-5)

    print("KERNEL_OK")
</pallas_src>

<mosaic_0001>
module attributes {stable_mosaic.version = 11 : i64} {
  func.func @_kernel_single_k(%arg0: i32, %arg1: i32, %arg2: memref<8x32xf32, #tpu.memory_space<vmem>>, %arg3: memref<32x128xf32, #tpu.memory_space<vmem>>, %arg4: memref<1x128xf32, #tpu.memory_space<vmem>>, %arg5: memref<8x128xf32, #tpu.memory_space<vmem>>) attributes {dimension_semantics = [#tpu.dimension_semantics<parallel>, #tpu.dimension_semantics<parallel>], iteration_bounds = array<i64: 1, 1>, scalar_prefetch = 0 : i64, scratch_operands = 0 : i64, tpu.core_type = #tpu.core_type<tc>, window_params = [{transform_indices = @transform_0, window_bounds = array<i64: 8, 32>}, {transform_indices = @transform_1, window_bounds = array<i64: 32, 128>}, {transform_indices = @transform_2, window_bounds = array<i64: 1, 128>}, {transform_indices = @transform_3, window_bounds = array<i64: 8, 128>}]} {
    %c0 = arith.constant 0 : index
    %c0_0 = arith.constant 0 : index
    %0 = vector.load %arg2[%c0, %c0_0] : memref<8x32xf32, #tpu.memory_space<vmem>>, vector<8x32xf32>
    %c0_1 = arith.constant 0 : index
    %c0_2 = arith.constant 0 : index
    %1 = vector.load %arg3[%c0_1, %c0_2] : memref<32x128xf32, #tpu.memory_space<vmem>>, vector<32x128xf32>
    %cst = arith.constant dense<0.000000e+00> : vector<8x128xf32>
    %2 = tpu.matmul %0, %1, %cst {dimension_numbers = #tpu.dot_dimension_numbers<[1], [0], [0], [1], [0, 0, 1, 1], [], []>} : vector<8x32xf32>, vector<32x128xf32>, vector<8x128xf32> -> vector<8x128xf32>
    %c0_3 = arith.constant 0 : index
    %c0_4 = arith.constant 0 : index
    %3 = vector.load %arg4[%c0_3, %c0_4] : memref<1x128xf32, #tpu.memory_space<vmem>>, vector<1x128xf32>
    %4 = vector.broadcast %3 : vector<1x128xf32> to vector<8x128xf32>
    %5 = arith.addf %2, %4 : vector<8x128xf32>
    %c0_5 = arith.constant 0 : index
    %c0_6 = arith.constant 0 : index
    %6 = vector.load %arg5[%c0_5, %c0_6] : memref<8x128xf32, #tpu.memory_space<vmem>>, vector<8x128xf32>
    tpu.vector_store %arg5[%c0_5, %c0_6], %5 {strides = array<i32>} : memref<8x128xf32, #tpu.memory_space<vmem>>, vector<8x128xf32>,
    return
  }
  func.func @transform_0(%arg0: i32, %arg1: i32) -> (i32, i32) {
    %c0_i32 = arith.constant 0 : i32
    %c0_i32_0 = arith.constant 0 : i32
    return %arg0, %c0_i32 : i32, i32
  }
  func.func @transform_1(%arg0: i32, %arg1: i32) -> (i32, i32) {
    %c0_i32 = arith.constant 0 : i32
    %c0_i32_0 = arith.constant 0 : i32
    return %c0_i32, %arg1 : i32, i32
  }
  func.func @transform_2(%arg0: i32, %arg1: i32) -> (i32, i32) {
    %c0_i32 = arith.constant 0 : i32
    %c0_i32_0 = arith.constant 0 : i32
    return %c0_i32, %arg1 : i32, i32
  }
  func.func @transform_3(%arg0: i32, %arg1: i32) -> (i32, i32) {
    %c0_i32 = arith.constant 0 : i32
    return %arg0, %arg1 : i32, i32
  }
}

</mosaic_0001>

<llo_original>
// kernel: tpu_custom_call.1
$region0: #{tpu_custom_call.1}
  #allocation0 [shape = 'u32[]', space=smem, size = 0x4, offset = 0x4, fixed_abs, tag = 'smem constant byte address 0x4 - core index']
  #allocation1 [shape = 'u32[144,128]{1,0:T(1,128)}', space=vmem, size = 0x12000, scoped, tag = 'internal scratch']
  %s0 = inlined_call_operand.hbm [shape: f32[8,32], index: 0, kind: input, shape index: {}]
  %s1 = inlined_call_operand.hbm [shape: f32[32,128], index: 1, kind: input, shape index: {}]
  %s2 = inlined_call_operand.vmem [shape: f32[1,128], index: 2, kind: input, shape index: {}]
  %s3 = inlined_call_operand.hbm [shape: f32[8,128], index: 3, kind: output, shape index: {}]
  %s4 = sld [smem:[#allocation0]]
  $region30: #{tpu_custom_call.1} parent=0
    _
  %s6 = ssub.s32 1, %s4
  %s7 = scalar_select 0, %s6, %s4
  $region1: #{tpu_custom_call.1} parent=0
    #allocation2 [shape = 'u8[4096]{0}', space=vmem, size = 0x1000, scoped, tag = 'input window, operand 0, single buffered']
    #allocation3 [shape = 's32[1]{0}', space=sflag, size = 0x4, scoped, tag = 'scoped memory for tpu_custom_call.1']
    #allocation4 [shape = 's32[1]{0}', space=sflag, size = 0x4, scoped, tag = 'scoped memory for tpu_custom_call.1']
    #allocation5 [shape = 'u8[16384]{0}', space=vmem, size = 0x4000, scoped, tag = 'input window, operand 1, single buffered']
    #allocation6 [shape = 's32[1]{0}', space=sflag, size = 0x4, scoped, tag = 'scoped memory for tpu_custom_call.1']
    #allocation7 [shape = 'u8[4096]{0}', space=vmem, size = 0x1000, scoped, tag = 'output window, operand 0, single buffered']
    %8 = vsyncpa [#allocation3], 0
    %9 = vsyncpa [#allocation6], 0
    %10 = vsyncpa [#allocation4], 0
    // Predicated region
    $region2: #{tpu_custom_call.1} parent=1 // pred_check
      _
    $region3: #{tpu_custom_call.1} parent=1 // pred_check_branch
      %12 = sbr.rel (0) target = $region5
    $region4: #{tpu_custom_call.1} parent=1 // pred_region
      %s14 = ssub.s32 128, 128
      %15 = vsyncadd [#allocation3], %s14
      %s17 = sshll.u32 [#allocation2], 4
      %s18 = int_to_ptr.vmem [resolvable:$true] %s17
      %20 = dma.hbm_to_vmem [thread:$0]  %s0, 128, %s18, [#allocation3]
    $region5: #{tpu_custom_call.1} parent=1 // pred_fallthru
      _
    // Predicated region
    $region6: #{tpu_custom_call.1} parent=1 // pred_check
      _
    $region7: #{tpu_custom_call.1} parent=1 // pred_check_branch
      %22 = sbr.rel (0) target = $region9
    $region8: #{tpu_custom_call.1} parent=1 // pred_region
      %s24 = ssub.s32 512, 512
      %25 = vsyncadd [#allocation6], %s24
      %s26 = sshll.u32 [#allocation5], 4
      %s27 = int_to_ptr.vmem [resolvable:$true] %s26
      %32 = dma.hbm_to_vmem [thread:$0]  %s1, 512, %s27, [#allocation6], 128, 128, 8
    $region9: #{tpu_custom_call.1} parent=1 // pred_fallthru
      _
    // Predicated region
    $region10: #{tpu_custom_call.1} parent=1 // pred_check
      _
    $region11: #{tpu_custom_call.1} parent=1 // pred_check_branch
      %34 = sbr.rel (0) target = $region13
    $region12: #{tpu_custom_call.1} parent=1 // pred_region
      _
    $region13: #{tpu_custom_call.1} parent=1 // pred_fallthru
      _
    // Predicated region
    $region14: #{tpu_custom_call.1} parent=1 // pred_check
      _
    $region15: #{tpu_custom_call.1} parent=1 // pred_check_branch
      %36 = sbr.rel (0) target = $region17
    $region16: #{tpu_custom_call.1} parent=1 // pred_region
      %37 = dma.done [#allocation3], 128
    $region17: #{tpu_custom_call.1} parent=1 // pred_fallthru
      _
    // Predicated region
    $region18: #{tpu_custom_call.1} parent=1 // pred_check
      _
    $region19: #{tpu_custom_call.1} parent=1 // pred_check_branch
      %39 = sbr.rel (0) target = $region21
    $region20: #{tpu_custom_call.1} parent=1 // pred_region
      %40 = dma.done [#allocation6], 512
    $region21: #{tpu_custom_call.1} parent=1 // pred_fallthru
      _
    %v41 = vld [vmem:[#allocation2] sm:$0xff]
    %v42 = vld [vmem:[#allocation5] sm:$0xff]
    %v43 = vld [vmem:[#allocation5 + $0x8] sm:$0xff]
    %v44 = vld [vmem:[#allocation5 + $0x10] sm:$0xff]
    %v45 = vld [vmem:[#allocation5 + $0x18] sm:$0xff]
    %v46 = vld [vmem:[%s2] sm:$0x1]
    %v48 = vlaneseq
    %v49 = vshrl.u32 %v48, 7
    %v50 = vsub.s32 0, %v49
    %v51 = vrot.slane %v46, %v50
    %vm53 = vcmask 261120
    %v55 = vsel %vm53, %v41, 0
    %57 = vmatprep.subr.mxu0 0.0
    %58 = vmatpush1.msra.mxu0 %v42
    %59 = vmatprep.subr.mxu0 0.0
    %60 = vmatpush1.msra.mxu0 %v43
    %61 = vmatprep.subr.mxu0 0.0
    %62 = vmatpush1.msra.mxu0 %v44
    %63 = vmatprep.subr.mxu0 0.0
    %64 = vmatpush1.msra.mxu0 %v45
    %65 = vmatprep.subr.mxu0 0.0
    %66 = vmatpush1.msra.mxu0 0.0
    %67 = vmatprep.subr.mxu0 0.0
    %68 = vmatpush1.msra.mxu0 0.0
    %69 = vmatprep.subr.mxu0 0.0
    %70 = vmatpush1.msra.mxu0 0.0
    %71 = vmatprep.subr.mxu0 0.0
    %72 = vmatpush1.msra.mxu0 0.0
    %73 = vmatprep.subr.mxu0 0.0
    %74 = vmatpush1.msra.mxu0 0.0
    %75 = vmatprep.subr.mxu0 0.0
    %76 = vmatpush1.msra.mxu0 0.0
    %77 = vmatprep.subr.mxu0 0.0
    %78 = vmatpush1.msra.mxu0 0.0
    %79 = vmatprep.subr.mxu0 0.0
    %80 = vmatpush1.msra.mxu0 0.0
    %81 = vmatprep.subr.mxu0 0.0
    %82 = vmatpush1.msra.mxu0 0.0
    %83 = vmatprep.subr.mxu0 0.0
    %84 = vmatpush1.msra.mxu0 0.0
    %85 = vmatprep.subr.mxu0 0.0
    %86 = vmatpush1.msra.mxu0 0.0
    %87 = vmatprep.subr.mxu0 0.0
    %88 = vmatpush1.msra.mxu0 0.0
    %89 = vmatprep.subr.mxu0 0.0
    %90 = vmatpush1.msra.mxu0 0.0
    %91 = vmatprep.subr.mxu0 0.0
    %92 = vmatpush1.msra.mxu0 0.0
    %93 = vmatprep.subr.mxu0 0.0
    %94 = vmatpush1.msra.mxu0 0.0
    %95 = vmatprep.subr.mxu0 0.0
    %96 = vmatpush1.msra.mxu0 0.0
    %97 = vmatprep.subr.mxu0 0.0
    %98 = vmatpush1.msra.mxu0 0.0
    %99 = vmatprep.subr.mxu0 0.0
    %100 = vmatpush1.msra.mxu0 0.0
    %101 = vmatprep.subr.mxu0 0.0
    %102 = vmatpush1.msra.mxu0 0.0
    %103 = vmatprep.subr.mxu0 0.0
    %104 = vmatpush1.msra.mxu0 0.0
    %105 = vmatprep.subr.mxu0 0.0
    %106 = vmatpush1.msra.mxu0 0.0
    %107 = vmatprep.subr.mxu0 0.0
    %108 = vmatpush1.msra.mxu0 0.0
    %109 = vmatprep.subr.mxu0 0.0
    %110 = vmatpush1.msra.mxu0 0.0
    %111 = vmatprep.subr.mxu0 0.0
    %112 = vmatpush1.msra.mxu0 0.0
    %113 = vmatprep.subr.mxu0 0.0
    %114 = vmatpush1.msra.mxu0 0.0
    %115 = vmatprep.subr.mxu0 0.0
    %116 = vmatpush1.msra.mxu0 0.0
    %117 = vmatprep.subr.mxu0 0.0
    %118 = vmatpush1.msra.mxu0 0.0
    %119 = vmatprep.subr.mxu0 0.0
    %120 = vmatpush1.msra.mxu0 0.0
    %121 = vmatprep.mubr.f32.mxu0 0.0
    %122 = vmatmul.mubr.f32.gmra.mrb[0].mxu0 %v55
    %v123 = vpop.f32.mrb[0].mxu0
    %v124 = vadd.f32 %v51, %v123
    %v125 = vpop.f32.mrb[0].mxu0
    %126 = vdwg.mxu0
    %127 = vst [vmem:[#allocation7] sm:$0xff] %v124
    // Predicated region
    $region22: #{tpu_custom_call.1} parent=1 // pred_check
      _
    $region23: #{tpu_custom_call.1} parent=1 // pred_check_branch
      %129 = sbr.rel (0) target = $region25
    $region24: #{tpu_custom_call.1} parent=1 // pred_region
      %s131 = ssub.s32 128, 128
      %132 = vsyncadd [#allocation4], %s131
      %s134 = sshll.u32 [#allocation7], 4
      %s135 = int_to_ptr.vmem [resolvable:$true] %s134
      %137 = dma.vmem_to_hbm [thread:$0]  %s135, 128, %s3, [#allocation4]
    $region25: #{tpu_custom_call.1} parent=1 // pred_fallthru
      _
    // Predicated region
    $region26: #{tpu_custom_call.1} parent=1 // pred_check
      _
    $region27: #{tpu_custom_call.1} parent=1 // pred_check_branch
      %139 = sbr.rel (0) target = $region29
    $region28: #{tpu_custom_call.1} parent=1 // pred_region
      %140 = dma.done [#allocation4], 128
    $region29: #{tpu_custom_call.1} parent=1 // pred_fallthru
      _
    %141 = vsyncpa [#allocation3], 1
    %142 = vsyncpa [#allocation6], 1
    %143 = vsyncpa [#allocation4], 1

</llo_original>
